<compile_context>
chip_gen: v7x
topology: tpu7x:2x2x1
jax: 0.10.0
libtpu: 0.0.40
codegen_flags: <defaults>
</compile_context>

<pallas_src>
import jax
import jax.numpy as jnp
from jax.experimental import pallas as pl
from jax.experimental.pallas import tpu as pltpu

_LANES = 128
# Leading "parallel" axis for the abs-max pass (v7x megacore).  On 1-TC chips
# (v5e/v6e) this is just a cheap sequential outer loop with identical traffic.
_NCORES = 2


def _vmem_capacity_bytes():
    try:
        return int(pltpu.get_tpu_info().vmem_capacity_bytes)
    except Exception:
        return 64 * 1024 * 1024   # conservative (v7x-sized) fallback


# ----------------------------------------------------------------------------
# Fast path: whole tensor resident in VMEM -> read once, write once, with the
# abs-max, scale, quantize and dequantize fused into a single pallas_call.
# ----------------------------------------------------------------------------
def _fakequant_small_kernel(w_ref, o_ref, scale_ref):
    w = w_ref[...].astype(jnp.float32)
    amax = jnp.max(jnp.abs(w))
    s = amax / 127.0 + 1e-8
    scale_ref[0, 0] = s
    q = jnp.clip(jnp.round(w / s), -128.0, 127.0)
    o_ref[...] = (q * s).astype(o_ref.dtype)


# ----------------------------------------------------------------------------
# Pass 1 (large tensors): per-core partial abs-max.  The (8,128) output block
# for core c stays resident across the inner grid axis and acts as the
# accumulator (VALU-only per tile); the ragged last tile is masked in-kernel.
# ----------------------------------------------------------------------------
def _make_absmax_kernel(tm, n_tiles, n_inner, rem):
    def kernel(w_ref, pmax_ref):
        c = pl.program_id(0)
        i = pl.program_id(1)

        @pl.when(i == 0)
        def _():
            pmax_ref[...] = jnp.zeros_like(pmax_ref)

        # TODO(synk): for bf16 inputs on v6e/v7x the running max could stay in
        # bf16 (abs/max are exact); kept f32 here since the pass is HBM-bound.
        w = jnp.abs(w_ref[...].astype(jnp.float32))
        if rem:
            # Last global tile is ragged: out-of-bounds rows read garbage,
            # so mask them to 0 (neutral for abs-max) before reducing.
            t = jnp.minimum(c * n_inner + i, n_tiles - 1)
            limit = jnp.where(t == n_tiles - 1, rem, tm)
            row_ids = jax.lax.broadcasted_iota(jnp.int32, (tm, _LANES), 0)
            w = jnp.where(row_ids < limit, w, 0.0)
        # Fold (tm,128) into a vreg-shaped (8,128) running max: pure VALU work
        # hidden under the DMA stream.  The one expensive cross-lane reduce
        # happens outside, on the tiny (NCORES,8,128) partials.
        chunk = jnp.max(w.reshape(tm // 8, 8, _LANES), axis=0)
        pmax_ref[...] = jnp.maximum(pmax_ref[...], chunk)

    return kernel


# ----------------------------------------------------------------------------
# Pass 2 (large tensors): elementwise fake-quantize with the global scale.
# Exact divide (matches PyTorch's w / scale path); free since HBM-bound.
# Ragged last tile: out-of-bounds writes are discarded by Pallas.
# ----------------------------------------------------------------------------
def _fakequant_kernel(scale_ref, w_ref, o_ref):
    s = scale_ref[0, 0]
    w = w_ref[...].astype(jnp.float32)
    q = jnp.clip(jnp.round(w / s), -128.0, 127.0)
    o_ref[...] = (q * s).astype(o_ref.dtype)


def _fake_quant8(w, *, allow_fast_path=True, tile_rows=None):
    """Pallas implementation of FakeQuant8.forward. Returns (out, scale)."""
    orig_shape = w.shape
    dtype = w.dtype
    total = int(w.size)
    itemsize = jnp.dtype(dtype).itemsize
    sub = 8 * max(1, 4 // itemsize)          # native sublane tiling for dtype

    rows = -(-total // _LANES)
    pad = rows * _LANES - total

    w_flat = w.reshape(-1)
    if pad:
        # Rare unaligned tail (<128 elems): zero-pad (neutral for the abs-max,
        # quantizes to exactly 0).  Aligned tensors pay no copy at all.
        w_flat = jnp.concatenate([w_flat, jnp.zeros((pad,), dtype=dtype)])
    w2 = w_flat.reshape(rows, _LANES)

    vmem_cap = _vmem_capacity_bytes()
    vmem_limit = int(min(vmem_cap * 3 // 4, 80 * 1024 * 1024))

    # ---------------- fast path: single call, tensor resident in VMEM --------
    live_bytes = rows * _LANES * (2 * itemsize + 8)   # in + out + f32 temps
    use_fast = (allow_fast_path and live_bytes <= vmem_limit // 2) or rows < sub
    if use_fast:
        out2, scale2d = pl.pallas_call(
            _fakequant_small_kernel,
            out_shape=(jax.ShapeDtypeStruct((rows, _LANES), dtype),
                       jax.ShapeDtypeStruct((1, 1), jnp.float32)),
            grid_spec=pltpu.PrefetchScalarGridSpec(
                num_scalar_prefetch=0,
                grid=(1,),
                in_specs=[pl.BlockSpec((rows, _LANES), lambda i: (0, 0))],
                out_specs=(pl.BlockSpec((rows, _LANES), lambda i: (0, 0)),
                           pl.BlockSpec(memory_space=pltpu.SMEM)),
            ),
            compiler_params=pltpu.CompilerParams(
                dimension_semantics=("arbitrary",),
                vmem_limit_bytes=vmem_limit),
            cost_estimate=pl.CostEstimate(
                flops=6 * rows * _LANES,
                transcendentals=rows * _LANES,
                bytes_accessed=2 * rows * _LANES * itemsize),
        )(w2)
        out_flat = out2.reshape(-1)
        if pad:
            out_flat = out_flat[:total]
        return out_flat.reshape(orig_shape), scale2d[0, 0]

    # ---------------- two-pass path: abs-max, then quantize -------------------
    # ~6-8 MiB input tiles (85%+ of HBM roofline); pass 2 keeps 4 live buffers,
    # so cap at vmem_limit/8 (=> 6 MiB on v7x's 64 MiB VMEM, 8 MiB on v5e/v6e).
    tile_bytes = min(8 * 1024 * 1024, vmem_limit // 8)
    target_rows = max(sub, (tile_bytes // (_LANES * itemsize)) // sub * sub)
    max_tm = (rows // sub) * sub             # rows >= sub on this path
    tm = min(target_rows, max_tm)
    if tile_rows is not None:                # testing knob: force small tiles
        tm = max(sub, min((tile_rows // sub) * sub, max_tm))
    n_tiles = -(-rows // tm)
    rem = rows % tm                          # static; 0 => no in-kernel masking
    n_inner = -(-n_tiles // _NCORES)

    # --- pass 1: per-core (8,128) partial abs-max (both TCs busy on v7x) -----
    pmax = pl.pallas_call(
        _make_absmax_kernel(tm, n_tiles, n_inner, rem),
        out_shape=jax.ShapeDtypeStruct((_NCORES, 8, _LANES), jnp.float32),
        grid_spec=pltpu.PrefetchScalarGridSpec(
            num_scalar_prefetch=0,
            grid=(_NCORES, n_inner),
            in_specs=[pl.BlockSpec(
                (tm, _LANES),
                # Clamp so the trailing core never indexes past the last tile;
                # re-processing a tile is harmless (max is idempotent).
                lambda c, i: (jnp.minimum(c * n_inner + i, n_tiles - 1), 0))],
            out_specs=pl.BlockSpec((None, 8, _LANES), lambda c, i: (c, 0, 0)),
        ),
        compiler_params=pltpu.CompilerParams(
            dimension_semantics=("parallel", "arbitrary"),
            vmem_limit_bytes=vmem_limit),
        cost_estimate=pl.CostEstimate(
            flops=2 * rows * _LANES,
            transcendentals=0,
            bytes_accessed=rows * _LANES * itemsize),
    )(w2)

    # Tiny (2,8,128) combine + scale computation: plain XLA glue.
    scale2d = (jnp.max(pmax) / 127.0 + 1e-8).reshape(1, 1).astype(jnp.float32)

    # --- pass 2: elementwise quantize -> dequantize, output in orig dtype -----
    out2 = pl.pallas_call(
        _fakequant_kernel,
        out_shape=jax.ShapeDtypeStruct((rows, _LANES), dtype),
        grid_spec=pltpu.PrefetchScalarGridSpec(
            num_scalar_prefetch=0,
            grid=(n_tiles,),
            in_specs=[pl.BlockSpec(memory_space=pltpu.SMEM),          # scale
                      pl.BlockSpec((tm, _LANES), lambda i: (i, 0))],  # w tile
            out_specs=pl.BlockSpec((tm, _LANES), lambda i: (i, 0)),
        ),
        compiler_params=pltpu.CompilerParams(
            dimension_semantics=("parallel",),
            vmem_limit_bytes=vmem_limit),
        cost_estimate=pl.CostEstimate(
            flops=4 * rows * _LANES,
            transcendentals=rows * _LANES,
            bytes_accessed=2 * rows * _LANES * itemsize),
    )(scale2d, w2)

    out_flat = out2.reshape(-1)
    if pad:
        out_flat = out_flat[:total]
    return out_flat.reshape(orig_shape), scale2d[0, 0]


fake_quant8 = jax.jit(_fake_quant8,
                      static_argnames=("allow_fast_path", "tile_rows"))


def _reference(w):
    wf = w.astype(jnp.float32)
    s = jnp.max(jnp.abs(wf)) / 127.0 + 1e-8
    q = jnp.clip(jnp.round(wf / s), -128.0, 127.0)
    return (q * s).astype(w.dtype), s


if __name__ == "__main__":
    key = jax.random.PRNGKey(0)
    k1, k2, k3 = jax.random.split(key, 3)

    def _check(x, **kw):
        out, scale = fake_quant8(x, **kw)
        out = jax.block_until_ready(out)
        ref_out, ref_scale = _reference(x)
        assert out.shape == x.shape and out.dtype == x.dtype
        assert jnp.allclose(scale, ref_scale, rtol=1e-6, atol=1e-8), (scale, ref_scale)
        # The in-kernel f32 divide may differ from XLA's divide by 1 ulp near a
        # round-half boundary; allow at most one quantization step.
        max_err = float(jnp.max(jnp.abs(out.astype(jnp.float32)
                                        - ref_out.astype(jnp.float32))))
        assert max_err <= float(ref_scale) * 1.0001, (max_err, float(ref_scale))

    # Main input (module-spec-sized NCHW weight/activation blob): fast path.
    x = jax.random.normal(k1, (2, 4, 16, 16), dtype=jnp.float32) * 0.37
    _check(x)

    # Exercise the large-tensor two-pass path on small deterministic inputs
    # (incl. ragged last tile masking + discarded out-of-bounds writes).
    x2 = jax.random.normal(k2, (2, 4, 16, 24), dtype=jnp.float32)
    _check(x2, allow_fast_path=False, tile_rows=16)

    # Unaligned element count (pad path) + ragged tiles.
    x3 = jax.random.normal(k3, (3, 5, 7, 11), dtype=jnp.float32) * 2.5
    _check(x3, allow_fast_path=False, tile_rows=8)

    print("KERNEL_OK")
</pallas_src>

<mosaic_0001>
module attributes {stable_mosaic.version = 11 : i64} {
  func.func @_fakequant_small_kernel(%arg0: i32, %arg1: memref<16x128xf32, #tpu.memory_space<vmem>>, %arg2: memref<16x128xf32, #tpu.memory_space<vmem>>, %arg3: memref<1x1xf32, #tpu.memory_space<smem>>) attributes {dimension_semantics = [#tpu.dimension_semantics<arbitrary>], iteration_bounds = array<i64: 1>, scalar_prefetch = 0 : i64, scratch_operands = 0 : i64, tpu.core_type = #tpu.core_type<tc>, window_params = [{pipeline_mode = #tpu.pipeline_mode<synchronous>, transform_indices = @transform_0, window_bounds = array<i64: 16, 128>}, {pipeline_mode = #tpu.pipeline_mode<synchronous>, transform_indices = @transform_1, window_bounds = array<i64: 16, 128>}, {transform_indices = @transform_2, window_bounds = array<i64: 1, 1>}]} {
    %c0 = arith.constant 0 : index
    %c0_0 = arith.constant 0 : index
    %0 = vector.load %arg1[%c0, %c0_0] : memref<16x128xf32, #tpu.memory_space<vmem>>, vector<16x128xf32>
    %1 = math.absf %0 : vector<16x128xf32>
    %2 = vector.shape_cast %1 : vector<16x128xf32> to vector<1x16x128xf32>
    %cst = arith.constant dense<0xFF800000> : vector<1xf32>
    %3 = vector.multi_reduction <maximumf>, %2, %cst [1, 2] : vector<1x16x128xf32> to vector<1xf32>
    %4 = vector.shape_cast %3 : vector<1xf32> to vector<1x1x1xf32>
    %5 = vector.extract %4[0, 0, 0] : f32 from vector<1x1x1xf32>
    %cst_1 = arith.constant 1.270000e+02 : f32
    %6 = arith.divf %5, %cst_1 : f32
    %cst_2 = arith.constant 9.99999993E-9 : f32
    %7 = arith.addf %6, %cst_2 : f32
    %c0_3 = arith.constant 0 : index
    %c0_4 = arith.constant 0 : index
    %8 = memref.load %arg3[%c0_3, %c0_4] : memref<1x1xf32, #tpu.memory_space<smem>>
    memref.store %7, %arg3[%c0_3, %c0_4] : memref<1x1xf32, #tpu.memory_space<smem>>
    %9 = vector.broadcast %7 : f32 to vector<16x128xf32>
    %10 = arith.divf %0, %9 : vector<16x128xf32>
    %11 = math.roundeven %10 : vector<16x128xf32>
    %cst_5 = arith.constant -1.280000e+02 : f32
    %cst_6 = arith.constant 1.270000e+02 : f32
    %12 = vector.broadcast %cst_5 : f32 to vector<16x128xf32>
    %13 = arith.maximumf %12, %11 : vector<16x128xf32>
    %14 = vector.broadcast %cst_6 : f32 to vector<16x128xf32>
    %15 = arith.minimumf %14, %13 : vector<16x128xf32>
    %16 = vector.broadcast %7 : f32 to vector<16x128xf32>
    %17 = arith.mulf %15, %16 : vector<16x128xf32>
    %c0_7 = arith.constant 0 : index
    %c0_8 = arith.constant 0 : index
    %18 = vector.load %arg2[%c0_7, %c0_8] : memref<16x128xf32, #tpu.memory_space<vmem>>, vector<16x128xf32>
    tpu.vector_store %arg2[%c0_7, %c0_8], %17 {strides = array<i32>} : memref<16x128xf32, #tpu.memory_space<vmem>>, vector<16x128xf32>,
    return
  }
  func.func @transform_0(%arg0: i32) -> (i32, i32) {
    %c0_i32 = arith.constant 0 : i32
    %c0_i32_0 = arith.constant 0 : i32
    %c0_i32_1 = arith.constant 0 : i32
    return %c0_i32, %c0_i32_0 : i32, i32
  }
  func.func @transform_1(%arg0: i32) -> (i32, i32) {
    %c0_i32 = arith.constant 0 : i32
    %c0_i32_0 = arith.constant 0 : i32
    %c0_i32_1 = arith.constant 0 : i32
    return %c0_i32, %c0_i32_0 : i32, i32
  }
  func.func @transform_2(%arg0: i32) -> (i32, i32) {
    %c0_i32 = arith.constant 0 : i32
    %c0_i32_0 = arith.constant 0 : i32
    %c0_i32_1 = arith.constant 0 : i32
    return %c0_i32, %c0_i32_0 : i32, i32
  }
}

</mosaic_0001>

<llo_original>
// kernel: _fake_quant8.1
$region0: #{_fake_quant8.1}
  #allocation0 [shape = 'u32[]', space=smem, size = 0x4, offset = 0x4, fixed_abs, tag = 'smem constant byte address 0x4 - core index']
  #allocation1 [shape = 'u32[144,128]{1,0:T(1,128)}', space=vmem, size = 0x12000, scoped, tag = 'internal scratch']
  %s0 = inlined_call_operand.vmem [shape: f32[16,128], index: 0, kind: input, shape index: {}]
  %s1 = inlined_call_operand.vmem [shape: f32[16,128], index: 1, kind: output, shape index: {0}]
  %s2 = inlined_call_operand.hbm [shape: f32[1,1], index: 2, kind: output, shape index: {1}]
  %3 = xla_tuple %s1, %s2
  %s4 = sld [smem:[#allocation0]]
  $region22: #{_fake_quant8.1} parent=0
    _
  %s6 = ssub.s32 1, %s4
  %s7 = scalar_select 0, %s6, %s4
  $region1: #{_fake_quant8.1} parent=0
    #allocation2 [shape = 'u8[512]{0}', space=smem, size = 0x200, scoped, tag = 'output window, operand 1, single buffered']
    #allocation3 [shape = 's32[1]{0}', space=sflag, size = 0x4, scoped, tag = 'scoped memory for _fake_quant8.1']
    %8 = vsyncpa [#allocation3], 0
    // Predicated region
    $region2: #{_fake_quant8.1} parent=1 // pred_check
      _
    $region3: #{_fake_quant8.1} parent=1 // pred_check_branch
      %10 = sbr.rel (0) target = $region5
    $region4: #{_fake_quant8.1} parent=1 // pred_region
      _
    $region5: #{_fake_quant8.1} parent=1 // pred_fallthru
      _
    %v11 = vld [vmem:[%s0] sm:$0xff]
    %v12 = vld [vmem:[%s0 + $0x8] sm:$0xff]
    %v13 = vand.u32 2147483647, %v11
    %v14 = vand.u32 2147483647, %v12
    %v15 = vmax.f32 %v13, %v14
    %16 = vmax.xlane.f32.xlu0 %v15
    %v17 = vpop.xlane.xlu0 %16
    %v18 = vrot.slane %v17, 4
    %v19 = vmax.f32 %v17, %v18
    %v20 = vrot.slane %v19, 2
    %v21 = vmax.f32 %v19, %v20
    %v22 = vrot.slane %v21, 1
    %v23 = vmax.f32 %v21, %v22
    %s24 = vtos %v23
    %v25 = vrcp.pop 127.0
    %s26 = vtos %v25
    %s27 = smul.f32 %s24, %s26
    %s28 = sadd.f32 %s27, 1e-08
    %s29 = scalar_lea.smem [#allocation2], 0
    %30 = sst [smem:[%s29]] %s28
    %v31 = vstv %s28
    %v32 = vrcp.pop %v31
    %v33 = vmul.f32 %v11, %v32
    %v34 = vmul.f32 %v12, %v32
    %v35 = vround.ne.pseudo %v33
    %v36 = vround.ne.pseudo %v34
    %v37 = vmax.f32 %v35, -128.0
    %v38 = vmax.f32 %v36, -128.0
    %v39 = vmin.f32 %v37, 127.0
    %v40 = vmin.f32 %v38, 127.0
    %v41 = vmul.f32 %v39, %v31
    %v42 = vmul.f32 %v40, %v31
    %43 = vst [vmem:[%s1] sm:$0xff] %v41
    %44 = vst [vmem:[%s1 + $0x8] sm:$0xff] %v42
    // Predicated region
    $region6: #{_fake_quant8.1} parent=1 // pred_check
      _
    $region7: #{_fake_quant8.1} parent=1 // pred_check_branch
      %46 = sbr.rel (0) target = $region9
    $region8: #{_fake_quant8.1} parent=1 // pred_region
      _
    $region9: #{_fake_quant8.1} parent=1 // pred_fallthru
      _
    // Predicated region
    $region10: #{_fake_quant8.1} parent=1 // pred_check
      _
    $region11: #{_fake_quant8.1} parent=1 // pred_check_branch
      %48 = sbr.rel (0) target = $region13
    $region12: #{_fake_quant8.1} parent=1 // pred_region
      %s50 = ssub.s32 16, 16
      %51 = vsyncadd [#allocation3], %s50
      %54 = dma.smem_to_hbm [#allocation2], 16, %s2, [#allocation3]
    $region13: #{_fake_quant8.1} parent=1 // pred_fallthru
      _
    // Predicated region
    $region14: #{_fake_quant8.1} parent=1 // pred_check
      _
    $region15: #{_fake_quant8.1} parent=1 // pred_check_branch
      %56 = sbr.rel (0) target = $region17
    $region16: #{_fake_quant8.1} parent=1 // pred_region
      _
    $region17: #{_fake_quant8.1} parent=1 // pred_fallthru
      _
    // Predicated region
    $region18: #{_fake_quant8.1} parent=1 // pred_check
      _
    $region19: #{_fake_quant8.1} parent=1 // pred_check_branch
      %58 = sbr.rel (0) target = $region21
    $region20: #{_fake_quant8.1} parent=1 // pred_region
      %59 = dma.done [#allocation3], 16
    $region21: #{_fake_quant8.1} parent=1 // pred_fallthru
      _
    %60 = sfence
    %61 = vsyncpa [#allocation3], 1

</llo_original>
